<compile_context>
chip_gen: v5e
topology: v5e:2x2
jax: 0.10.0
libtpu: 0.0.40
codegen_flags: <defaults>
</compile_context>

<pallas_src>
import functools

import jax
import jax.numpy as jnp
from jax.experimental import pallas as pl
from jax.experimental.pallas import tpu as pltpu

LANE = 128
_MiB = 1024 * 1024


# ---------------------------------------------------------------------------
# Generation-aware sizing
# ---------------------------------------------------------------------------
@functools.lru_cache(maxsize=1)
def _chip_config():
    """Pick block / threshold sizes from the chip's VMEM capacity.

    Falls back to values that are safe on the smallest-VMEM generation (v7x,
    64 MiB physical VMEM) if the query fails.
    """
    vmem_cap = 64 * _MiB
    try:
        info = pltpu.get_tpu_info()
        cap = getattr(info, "vmem_capacity_bytes", None)
        if cap:
            vmem_cap = int(cap)
    except Exception:
        pass

    if vmem_cap >= 128 * _MiB:
        # v5e / v6e: 128 MiB physical VMEM -> big blocks, big fused threshold.
        return {
            "block_bytes": 8 * _MiB,           # per-grid-step streaming block
            "fused_max_f32_bytes": 12 * _MiB,  # fused path if n*4 <= this
            "tiled_vmem_limit": 64 * _MiB,
            "fused_vmem_limit": 100 * _MiB,
        }
    # v7x (or unknown): 64 MiB physical VMEM -> leave headroom.
    return {
        "block_bytes": 4 * _MiB,
        "fused_max_f32_bytes": 6 * _MiB,
        "tiled_vmem_limit": 32 * _MiB,
        "fused_vmem_limit": 48 * _MiB,
    }


# ---------------------------------------------------------------------------
# Kernels
# ---------------------------------------------------------------------------
def _fused_kernel(x_ref, o_ref):
    """Whole tensor resident in VMEM: sum of squares + scale in one pass."""
    x = x_ref[...].astype(jnp.float32)
    s = jnp.sum(x * x)
    inv = 1.0 / jnp.sqrt(s)
    o_ref[...] = (x * inv).astype(o_ref.dtype)


def _sumsq_tile_kernel(x_ref, out_ref):
    """Per-tile partial sum of squares, reduced only along sublane groups
    (pure VPU adds) into an (8, 128) partial. No carried state -> parallel."""
    x = x_ref[...].astype(jnp.float32)
    x2 = x * x
    out_ref[...] = jnp.sum(x2.reshape(-1, 8, LANE), axis=0)


def _sumsq_tile_ragged_kernel(x_ref, out_ref, *, valid_rows, row_tile):
    """Same as above, but the row mask is applied ONLY on the last tile
    (the last block's trailing rows read unspecified padded data)."""
    i = pl.program_id(0)
    last = pl.num_programs(0) - 1
    x = x_ref[...].astype(jnp.float32)

    @pl.when(i != last)
    def _():
        x2 = x * x
        out_ref[...] = jnp.sum(x2.reshape(-1, 8, LANE), axis=0)

    @pl.when(i == last)
    def _():
        rid = jax.lax.broadcasted_iota(jnp.int32, (row_tile, LANE), 0)
        local_valid = valid_rows - i * row_tile
        xm = jnp.where(rid < local_valid, x, 0.0)
        x2 = xm * xm
        out_ref[...] = jnp.sum(x2.reshape(-1, 8, LANE), axis=0)


def _scale_kernel(inv_ref, x_ref, o_ref):
    """Elementwise multiply each tile by the precomputed 1/||x||_F.
    `inv_ref` lives in SMEM (loop-invariant scalar)."""
    inv = inv_ref[0]
    o_ref[...] = (x_ref[...].astype(jnp.float32) * inv).astype(o_ref.dtype)


# ---------------------------------------------------------------------------
# Wrapper
# ---------------------------------------------------------------------------
def frobenius_normalize(x: jax.Array) -> jax.Array:
    """out = x / sqrt(sum(x**2)), computed with Pallas TPU kernels."""
    orig_shape = x.shape
    dtype = x.dtype
    n = x.size
    cfg = _chip_config()

    xf = x.reshape(-1)
    rows = pl.cdiv(n, LANE)
    padded = rows * LANE
    if padded != n:
        # Rare case: numel not a multiple of 128. Zero-pad (zeros don't change
        # the sum of squares); padded outputs are sliced off at the end.
        xf = jnp.pad(xf, (0, padded - n))
    x2d = xf.reshape(rows, LANE)          # contiguous reshape: no copy

    # Gate the fused path on the f32 working-copy size (conservative for all
    # input dtypes w.r.t. VMEM use).
    if n * 4 <= cfg["fused_max_f32_bytes"]:
        # ---- fused path: one launch, read once + write once ----
        out2d = pl.pallas_call(
            _fused_kernel,
            out_shape=jax.ShapeDtypeStruct((rows, LANE), dtype),
            compiler_params=pltpu.CompilerParams(
                vmem_limit_bytes=cfg["fused_vmem_limit"]),
        )(x2d)
    else:
        # Rows per tile chosen so the block stays ~block_bytes for any dtype.
        itemsize = jnp.dtype(dtype).itemsize
        row_tile = max(1024, cfg["block_bytes"] // (LANE * itemsize))
        row_tile = (row_tile // 8) * 8
        n_tiles = pl.cdiv(rows, row_tile)

        if rows % row_tile == 0:
            sumsq_kernel = _sumsq_tile_kernel
        else:
            sumsq_kernel = functools.partial(
                _sumsq_tile_ragged_kernel, valid_rows=rows, row_tile=row_tile)

        # ---- pass 1: per-tile partial sums of squares (parallel grid) ----
        partials = pl.pallas_call(
            sumsq_kernel,
            out_shape=jax.ShapeDtypeStruct((n_tiles * 8, LANE), jnp.float32),
            grid=(n_tiles,),
            in_specs=[pl.BlockSpec((row_tile, LANE), lambda i: (i, 0))],
            out_specs=pl.BlockSpec((8, LANE), lambda i: (i, 0)),
            compiler_params=pltpu.CompilerParams(
                dimension_semantics=("parallel",),
                vmem_limit_bytes=cfg["tiled_vmem_limit"]),
        )(x2d)

        sumsq = jnp.sum(partials)                       # tiny reduce in XLA
        inv = (1.0 / jnp.sqrt(sumsq)).astype(jnp.float32).reshape(1)

        # ---- pass 2: elementwise scale by 1/||x||_F (scalar via SMEM) ----
        out2d = pl.pallas_call(
            _scale_kernel,
            out_shape=jax.ShapeDtypeStruct((rows, LANE), dtype),
            grid=(n_tiles,),
            in_specs=[pl.BlockSpec(memory_space=pltpu.MemorySpace.SMEM),
                      pl.BlockSpec((row_tile, LANE), lambda i: (i, 0))],
            out_specs=pl.BlockSpec((row_tile, LANE), lambda i: (i, 0)),
            compiler_params=pltpu.CompilerParams(
                dimension_semantics=("parallel",),
                vmem_limit_bytes=cfg["tiled_vmem_limit"]),
        )(inv, x2d)

    if padded != n:
        return out2d.reshape(-1)[:n].reshape(orig_shape)
    return out2d.reshape(orig_shape)


if __name__ == "__main__":
    # 1) Small input (matches the module's forward): fused single-call path.
    x_small = jax.random.normal(jax.random.PRNGKey(0), (2, 4, 16, 16),
                                dtype=jnp.float32)
    out_small = jax.block_until_ready(frobenius_normalize(x_small))
    ref_small = x_small / jnp.sqrt(jnp.sum(x_small * x_small))
    assert out_small.shape == x_small.shape
    assert jnp.allclose(out_small, ref_small, rtol=1e-5, atol=1e-6), \
        "mismatch vs reference (fused path)"

    # 2) Tiny input with numel % 128 != 0: exercises the padded fused path.
    x_odd = jax.random.normal(jax.random.PRNGKey(2), (7, 13, 5),
                              dtype=jnp.float32)
    out_odd = jax.block_until_ready(frobenius_normalize(x_odd))
    ref_odd = x_odd / jnp.sqrt(jnp.sum(x_odd * x_odd))
    assert out_odd.shape == x_odd.shape
    assert jnp.allclose(out_odd, ref_odd, rtol=1e-5, atol=1e-6), \
        "mismatch vs reference (padded fused path)"

    # 3) Larger input: exercises the tiled two-pass path on every generation
    #    (> 12 MiB f32) including the masked ragged last tile.
    x_big = jax.random.normal(jax.random.PRNGKey(1), (4, 4, 520, 512),
                              dtype=jnp.float32)
    out_big = jax.block_until_ready(frobenius_normalize(x_big))
    ref_big = x_big / jnp.sqrt(jnp.sum(x_big * x_big))
    assert out_big.shape == x_big.shape
    assert jnp.allclose(out_big, ref_big, rtol=3e-5, atol=1e-6), \
        "mismatch vs reference (two-pass path)"

    print("KERNEL_OK")
</pallas_src>

<mosaic_0001>
module attributes {stable_mosaic.version = 11 : i64} {
  func.func @_fused_kernel(%arg0: memref<16x128xf32, #tpu.memory_space<vmem>>, %arg1: memref<16x128xf32, #tpu.memory_space<vmem>>) attributes {dimension_semantics = [], scalar_prefetch = 0 : i64, scratch_operands = 0 : i64, tpu.core_type = #tpu.core_type<tc>} {
    %c0 = arith.constant 0 : index
    %c0_0 = arith.constant 0 : index
    %0 = vector.load %arg0[%c0, %c0_0] : memref<16x128xf32, #tpu.memory_space<vmem>>, vector<16x128xf32>
    %1 = arith.mulf %0, %0 : vector<16x128xf32>
    %2 = vector.shape_cast %1 : vector<16x128xf32> to vector<1x16x128xf32>
    %cst = arith.constant dense<0.000000e+00> : vector<1xf32>
    %3 = vector.multi_reduction <add>, %2, %cst [1, 2] : vector<1x16x128xf32> to vector<1xf32>
    %4 = vector.shape_cast %3 : vector<1xf32> to vector<1x1x1xf32>
    %5 = vector.extract %4[0, 0, 0] : f32 from vector<1x1x1xf32>
    %6 = math.sqrt %5 : f32
    %cst_1 = arith.constant 1.000000e+00 : f32
    %7 = arith.divf %cst_1, %6 : f32
    %8 = vector.broadcast %7 : f32 to vector<16x128xf32>
    %9 = arith.mulf %0, %8 : vector<16x128xf32>
    %c0_2 = arith.constant 0 : index
    %c0_3 = arith.constant 0 : index
    %10 = vector.load %arg1[%c0_2, %c0_3] : memref<16x128xf32, #tpu.memory_space<vmem>>, vector<16x128xf32>
    tpu.vector_store %arg1[%c0_2, %c0_3], %9 {strides = array<i32>} : memref<16x128xf32, #tpu.memory_space<vmem>>, vector<16x128xf32>,
    return
  }
}

</mosaic_0001>

<llo_original>
// kernel: tpu_custom_call.1
$region0: #{tpu_custom_call.1}
  #allocation0 [shape = 'u32[]', space=smem, size = 0x4, offset = 0x4, fixed_abs, tag = 'smem constant byte address 0x4 - core index']
  #allocation1 [shape = 'u32[72,128]{1,0:T(1,128)}', space=vmem, size = 0x9000, scoped, tag = 'internal scratch']
  %s0 = inlined_call_operand.hbm [shape: f32[16,128], index: 0, kind: input, shape index: {}]
  %s1 = inlined_call_operand.hbm [shape: f32[16,128], index: 1, kind: output, shape index: {}]
  %s2 = sld [smem:[#allocation0]]
  $region18: #{tpu_custom_call.1} parent=0
    _
  %s4 = ssub.s32 1, %s2
  %s5 = scalar_select 0, %s4, %s2
  $region1: #{tpu_custom_call.1} parent=0
    #allocation2 [shape = 'u8[8192]{0}', space=vmem, size = 0x2000, scoped, tag = 'input window, operand 0, single buffered']
    #allocation3 [shape = 's32[1]{0}', space=sflag, size = 0x4, scoped, tag = 'scoped memory for tpu_custom_call.1']
    #allocation4 [shape = 's32[1]{0}', space=sflag, size = 0x4, scoped, tag = 'scoped memory for tpu_custom_call.1']
    #allocation5 [shape = 'u8[8192]{0}', space=vmem, size = 0x2000, scoped, tag = 'output window, operand 0, single buffered']
    %6 = vsyncpa [#allocation3], 0
    %7 = vsyncpa [#allocation4], 0
    // Predicated region
    $region2: #{tpu_custom_call.1} parent=1 // pred_check
      _
    $region3: #{tpu_custom_call.1} parent=1 // pred_check_branch
      %9 = sbr.rel (0) target = $region5
    $region4: #{tpu_custom_call.1} parent=1 // pred_region
      %11 = vsyncadd [#allocation3], 0
      %s12 = sshll.u32 %s0, 4
      %s13 = int_to_ptr.hbm [resolvable:$true] %s12
      %s14 = sshll.u32 [#allocation2], 4
      %s15 = int_to_ptr.vmem [resolvable:$true] %s14
      %20 = dma.hbm_to_vmem [thread:$0]  %s13, 256, %s15, [#allocation3], 128, 128, 8
    $region5: #{tpu_custom_call.1} parent=1 // pred_fallthru
      _
    // Predicated region
    $region6: #{tpu_custom_call.1} parent=1 // pred_check
      _
    $region7: #{tpu_custom_call.1} parent=1 // pred_check_branch
      %22 = sbr.rel (0) target = $region9
    $region8: #{tpu_custom_call.1} parent=1 // pred_region
      %24 = dma.done [#allocation3], 256
    $region9: #{tpu_custom_call.1} parent=1 // pred_fallthru
      _
    %v25 = vld [vmem:[#allocation2] sm:$0xff]
    %v26 = vld [vmem:[#allocation2 + $0x8] sm:$0xff]
    %v27 = vmul.f32 %v25, %v25
    %v28 = vmul.f32 %v26, %v26
    %v29 = vadd.f32 %v27, %v28
    %30 = vadd.xlane.f32.xlu0 %v29
    %v31 = vpop.xlane.xlu0 %30
    %v32 = vrot.slane %v31, 4
    %v33 = vadd.f32 %v31, %v32
    %v34 = vrot.slane %v33, 2
    %v35 = vadd.f32 %v33, %v34
    %v36 = vrot.slane %v35, 1
    %v37 = vadd.f32 %v35, %v36
    %s38 = vtos %v37
    %v39 = vstv %s38
    %v40 = vrsqrt.pop %v39
    %v41 = vmul.f32 %v40, %v39
    %v42 = vmul.f32 %v41, %v40
    %v43 = vmul.f32 0.5, %v42
    %v44 = vsub.f32 1.5, %v43
    %v45 = vmul.f32 %v40, %v44
    %v46 = vmul.f32 %v39, %v45
    %vm47 = vcmp.eq.f32.partialorder %v39, inf
    %v48 = vsel %vm47, %v39, %v46
    %vm49 = vcmp.eq.f32.partialorder %v39, 0.0
    %v50 = vand.u32 %v39, 2147483648
    %v51 = vsel %vm49, %v50, %v48
    %s52 = vtos %v51
    %v53 = vstv %s52
    %v54 = vrcp.pop %v53
    %v55 = vmul.f32 %v53, %v54
    %v56 = vsub.f32 1.0, %v55
    %v57 = vmul.f32 %v54, %v56
    %v58 = vadd.f32 %v54, %v57
    %vm59 = vweird.f32 %v53
    %vm60 = vweird.f32 %v54
    %vm61 = vmor %vm59, %vm60
    %v62 = vsel %vm61, %v54, %v58
    %v63 = vand.u32 2147483647, %v53
    %vm64 = vcmp.eq.f32.partialorder %v63, 8.507059e+37
    %v65 = vand.u32 %v53, 2147483648
    %v66 = vor.u32 1.1754944e-38, %v65
    %v67 = vsel %vm64, %v66, %v62
    %s68 = vtos %v67
    %v69 = vstv %s68
    %v70 = vmul.f32 %v25, %v69
    %v71 = vmul.f32 %v26, %v69
    %72 = vst [vmem:[#allocation5] sm:$0xff] %v70
    %73 = vst [vmem:[#allocation5 + $0x8] sm:$0xff] %v71
    // Predicated region
    $region10: #{tpu_custom_call.1} parent=1 // pred_check
      _
    $region11: #{tpu_custom_call.1} parent=1 // pred_check_branch
      %75 = sbr.rel (0) target = $region13
    $region12: #{tpu_custom_call.1} parent=1 // pred_region
      %77 = vsyncadd [#allocation4], 0
      %s78 = sshll.u32 [#allocation5], 4
      %s79 = int_to_ptr.vmem [resolvable:$true] %s78
      %s80 = sshll.u32 %s1, 4
      %s81 = int_to_ptr.hbm [resolvable:$true] %s80
      %86 = dma.vmem_to_hbm [thread:$0]  %s79, 256, %s81, [#allocation4], 128, 128, 8
    $region13: #{tpu_custom_call.1} parent=1 // pred_fallthru
      _
    // Predicated region
    $region14: #{tpu_custom_call.1} parent=1 // pred_check
      _
    $region15: #{tpu_custom_call.1} parent=1 // pred_check_branch
      %88 = sbr.rel (0) target = $region17
    $region16: #{tpu_custom_call.1} parent=1 // pred_region
      %90 = dma.done [#allocation4], 256
    $region17: #{tpu_custom_call.1} parent=1 // pred_fallthru
      _
    %91 = vsyncpa [#allocation3], 1
    %92 = vsyncpa [#allocation4], 1

</llo_original>
